<compile_context>
chip_gen: v5e
topology: v5e:2x2
jax: 0.10.0
libtpu: 0.0.40
codegen_flags: <defaults>
</compile_context>

<pallas_src>
import functools
import math

import jax
import jax.numpy as jnp
from jax.experimental import pallas as pl
from jax.experimental.pallas import tpu as pltpu

_LANES = 128              # vreg lane width
_SUBLANES = 8             # f32 sublane tile
_MAX_BLOCK_ROWS = 8192    # 4 MiB per f32 input tile per buffer
_NUM_CORES = 2            # v7x has 2 TensorCores; harmless (serial) elsewhere

_EPS = 1e-6
_LOG_EPS = math.log(_EPS)


def _ipow(v, k):
    """v ** k for a small positive integer k using only VPU multiplies."""
    out = v
    for _ in range(k - 1):
        out = out * v
    return out


def _focal_loss_kernel(p_ref, y_ref, out_ref, acc_ref, *,
                       alpha0, alpha1, gamma, block_rows, blocks_per_core,
                       num_blocks, full_rows, rem, mask_possible,
                       dup_possible):
    c = pl.program_id(0)                      # "core" axis (parallel)
    j = pl.program_id(1)                      # per-core block axis (arbitrary)
    gblock = c * blocks_per_core + j          # intended (unclamped) block idx

    @pl.when(j == 0)
    def _init():
        acc_ref[...] = jnp.zeros_like(acc_ref)

    def _partial_sum(v):
        # (block_rows,128) -> (8,128): tile-aligned reshape, pure VPU adds.
        return jnp.sum(v.reshape(block_rows // _SUBLANES, _SUBLANES, _LANES),
                       axis=0)

    def _compute_and_accumulate():
        x = p_ref[...].astype(jnp.float32)
        y = y_ref[...].astype(jnp.float32)

        # Stable log-sigmoid from logits (1 EUP exp + 1 EUP log):
        #   m = max(x, 0)
        #   log p     = x - m - log(1 + e^{-|x|})
        #   log (1-p) =   - m - log(1 + e^{-|x|})
        e = jnp.exp(-jnp.abs(x))
        log1pe = jnp.log(1.0 + e)
        m = jnp.maximum(x, 0.0)
        # Clamping at log(1e-6) reproduces the reference clip() exactly where
        # it matters (the residual upper-clip difference is ~1e-18).
        log_p = jnp.maximum(x - m - log1pe, _LOG_EPS)
        log_1mp = jnp.maximum((-m) - log1pe, _LOG_EPS)

        if float(gamma) == 0.0:
            pow_1mp = jnp.ones_like(x)
            pow_p = jnp.ones_like(x)
        elif float(gamma).is_integer() and 0.0 < gamma <= 8.0:
            # p / (1-p) rebuilt from the clamped logs: 2 EUP exps, no divide,
            # no extra clip ops; gamma=2 is then a single VPU square.
            one_m_p = jnp.exp(log_1mp)
            p = jnp.exp(log_p)
            pow_1mp = _ipow(one_m_p, int(gamma))
            pow_p = _ipow(p, int(gamma))
        else:
            pow_1mp = jnp.exp(gamma * log_1mp)
            pow_p = jnp.exp(gamma * log_p)

        # fc = -a0*(1-p)^g*log(p)*y - (1-a1)*p^g*log(1-p)*(1-y)
        # Kept in multiply form so non-binary / soft labels keep the exact
        # reference semantics (the where() form assumes y in {0,1}).
        t_pos = pow_1mp * log_p * y
        t_neg = pow_p * log_1mp * (1.0 - y)
        loss = (-alpha0) * t_pos + (alpha1 - 1.0) * t_neg

        if mask_possible:
            # Only blocks reaching past the last fully-valid row need a mask.
            needs_mask = (gblock + 1) * block_rows > full_rows

            @pl.when(needs_mask)
            def _masked():
                row = jax.lax.broadcasted_iota(
                    jnp.int32, (block_rows, _LANES), 0)
                grow = gblock * block_rows + row
                valid = grow < full_rows
                if rem:
                    col = jax.lax.broadcasted_iota(
                        jnp.int32, (block_rows, _LANES), 1)
                    valid = jnp.logical_or(
                        valid,
                        jnp.logical_and(grow == full_rows, col < rem))
                acc_ref[...] += _partial_sum(jnp.where(valid, loss, 0.0))

            @pl.when(jnp.logical_not(needs_mask))
            def _unmasked():
                acc_ref[...] += _partial_sum(loss)
        else:
            acc_ref[...] += _partial_sum(loss)

    if dup_possible:
        # With 2 "cores" and an odd block count the last (c, j) step is a
        # duplicate; its index_map is clamped to the previous block (so no
        # extra DMA is issued) and the compute is skipped here.
        pl.when(gblock < num_blocks)(_compute_and_accumulate)
    else:
        _compute_and_accumulate()

    @pl.when(j == pl.num_programs(1) - 1)
    def _finalize():
        out_ref[0] = acc_ref[...]


def focal_loss(preds, label, alpha=(0.5, 0.5), gamma=2.0,
               max_block_rows=_MAX_BLOCK_ROWS):
    """Pallas TPU focal loss.  Returns a scalar == 2 * mean(fc_loss)."""
    assert preds.shape == label.shape
    n = preds.size
    assert n > 0

    full_rows, rem = divmod(n, _LANES)        # complete 128-wide rows / tail
    n_rows = full_rows + (1 if rem else 0)
    padded_rows = ((n_rows + _SUBLANES - 1) // _SUBLANES) * _SUBLANES

    flat_p = preds.reshape(-1)
    flat_y = label.reshape(-1)
    pad = padded_rows * _LANES - n
    if pad:
        # TODO(synk): XLA materializes an O(n) copy for this pad; it is only
        # hit when n is not a multiple of 1024 elements (a manual-DMA kernel
        # over pl.ANY would avoid it).  Block-level raggedness needs no pad.
        flat_p = jnp.pad(flat_p, (0, pad))
        flat_y = jnp.pad(flat_y, (0, pad))
    p2 = flat_p.reshape(padded_rows, _LANES)
    y2 = flat_y.reshape(padded_rows, _LANES)

    max_block_rows = max(_SUBLANES,
                         (int(max_block_rows) // _SUBLANES) * _SUBLANES)
    block_rows = min(max_block_rows, padded_rows)
    num_blocks = pl.cdiv(padded_rows, block_rows)
    num_cores = _NUM_CORES if num_blocks >= 2 else 1
    blocks_per_core = pl.cdiv(num_blocks, num_cores)

    ragged_block = num_blocks * block_rows != padded_rows
    dup_possible = num_cores * blocks_per_core != num_blocks
    mask_possible = bool(pad) or ragged_block or dup_possible

    if dup_possible:
        # Clamp so duplicate steps re-use the previously fetched block
        # (same consecutive block index -> Pallas skips the re-fetch).
        def in_index(c, j):
            return (jnp.minimum(c * blocks_per_core + j, num_blocks - 1), 0)
    else:
        def in_index(c, j):
            return (c * blocks_per_core + j, 0)

    in_spec = pl.BlockSpec((block_rows, _LANES), in_index)
    out_spec = pl.BlockSpec((1, _SUBLANES, _LANES), lambda c, j: (c, 0, 0))

    kernel = functools.partial(
        _focal_loss_kernel,
        alpha0=float(alpha[0]), alpha1=float(alpha[1]), gamma=float(gamma),
        block_rows=block_rows, blocks_per_core=blocks_per_core,
        num_blocks=num_blocks, full_rows=full_rows, rem=rem,
        mask_possible=mask_possible, dup_possible=dup_possible)

    # 2 inputs x 2 pipeline buffers + small headroom; never below 32 MiB so
    # the default-block configuration also fits v5e's 16 MiB scoped default.
    block_bytes = block_rows * _LANES * (p2.dtype.itemsize + y2.dtype.itemsize)
    vmem_limit = int(max(32 * 1024 * 1024, 2 * block_bytes + (4 << 20)))

    partials = pl.pallas_call(
        kernel,
        out_shape=jax.ShapeDtypeStruct((num_cores, _SUBLANES, _LANES),
                                       jnp.float32),
        grid_spec=pltpu.PrefetchScalarGridSpec(
            num_scalar_prefetch=0,
            grid=(num_cores, blocks_per_core),
            in_specs=[in_spec, in_spec],
            out_specs=out_spec,
            scratch_shapes=[pltpu.VMEM((_SUBLANES, _LANES), jnp.float32)],
        ),
        compiler_params=pltpu.CompilerParams(
            dimension_semantics=("parallel", "arbitrary"),
            vmem_limit_bytes=vmem_limit,
        ),
    )(p2, y2)

    # Tiny epilogue: cross-core + cross-lane reduce and the 2/n scale.
    return jnp.sum(partials) * (2.0 / n)


def _focal_loss_ref(preds, label, alpha=(0.5, 0.5), gamma=2.0):
    p = jax.nn.sigmoid(preds.astype(jnp.float32))
    p = jnp.clip(p, 1e-6, 1.0 - 1e-6)
    y = label.astype(jnp.float32)
    fc = -alpha[0] * (1.0 - p) ** gamma * jnp.log(p) * y
    fc = fc - (1.0 - alpha[1]) * p ** gamma * jnp.log(1.0 - p) * (1.0 - y)
    return 2.0 * jnp.mean(fc)


if __name__ == "__main__":
    key = jax.random.PRNGKey(0)
    k1, k2, k3, k4, k5, k6 = jax.random.split(key, 6)

    # 1) Spec shape: NCHW logits + binary labels (2, 4, 16, 16).
    preds = jax.random.normal(k1, (2, 4, 16, 16), dtype=jnp.float32)
    label = (jax.random.uniform(k2, (2, 4, 16, 16)) > 0.5).astype(jnp.float32)
    out = jax.block_until_ready(focal_loss(preds, label))
    ref = _focal_loss_ref(preds, label)
    assert jnp.allclose(out, ref, rtol=1e-5, atol=1e-6), (out, ref)

    # 2) Multi-block path (small block cap exercises the dual-core split, the
    #    ragged boundary block, in-kernel masking and the duplicate-step skip).
    p2 = jax.random.normal(k3, (2, 3, 40, 40), dtype=jnp.float32)
    l2 = (jax.random.uniform(k4, (2, 3, 40, 40)) > 0.5).astype(jnp.float32)
    out2 = jax.block_until_ready(
        focal_loss(p2, l2, alpha=(0.25, 0.75), gamma=3.0, max_block_rows=32))
    ref2 = _focal_loss_ref(p2, l2, alpha=(0.25, 0.75), gamma=3.0)
    assert jnp.allclose(out2, ref2, rtol=1e-5, atol=1e-6), (out2, ref2)

    # 3) Lane-ragged element count, bf16 logits, soft labels, non-int gamma.
    p3 = jax.random.normal(k5, (2, 3, 7, 11), dtype=jnp.bfloat16)
    l3 = jax.random.uniform(k6, (2, 3, 7, 11), dtype=jnp.float32)
    out3 = jax.block_until_ready(focal_loss(p3, l3, gamma=1.5))
    ref3 = _focal_loss_ref(p3, l3, gamma=1.5)
    assert jnp.allclose(out3, ref3, rtol=1e-5, atol=1e-6), (out3, ref3)

    print("KERNEL_OK")
</pallas_src>

<mosaic_0001>
module attributes {stable_mosaic.version = 11 : i64} {
  func.func @_focal_loss_kernel(%arg0: i32, %arg1: i32, %arg2: memref<16x128xf32, #tpu.memory_space<vmem>>, %arg3: memref<16x128xf32, #tpu.memory_space<vmem>>, %arg4: memref<1x8x128xf32, #tpu.memory_space<vmem>>, %arg5: memref<8x128xf32, #tpu.memory_space<vmem>>) attributes {dimension_semantics = [#tpu.dimension_semantics<parallel>, #tpu.dimension_semantics<arbitrary>], iteration_bounds = array<i64: 1, 1>, scalar_prefetch = 0 : i64, scratch_operands = 1 : i64, tpu.core_type = #tpu.core_type<tc>, window_params = [{transform_indices = @transform_0, window_bounds = array<i64: 16, 128>}, {transform_indices = @transform_1, window_bounds = array<i64: 16, 128>}, {transform_indices = @transform_2, window_bounds = array<i64: 1, 8, 128>}]} {
    %c0_i32 = arith.constant 0 : i32
    %0 = arith.cmpi eq, %arg1, %c0_i32 : i32
    %1 = arith.extui %0 : i1 to i32
    %c0_i32_0 = arith.constant 0 : i32
    %2 = arith.cmpi ne, %1, %c0_i32_0 : i32
    scf.if %2 {
      %cst_19 = arith.constant 0.000000e+00 : f32
      %46 = vector.broadcast %cst_19 : f32 to vector<8x128xf32>
      %c0_20 = arith.constant 0 : index
      %c0_21 = arith.constant 0 : index
      %47 = vector.load %arg5[%c0_20, %c0_21] : memref<8x128xf32, #tpu.memory_space<vmem>>, vector<8x128xf32>
      tpu.vector_store %arg5[%c0_20, %c0_21], %46 {strides = array<i32>} : memref<8x128xf32, #tpu.memory_space<vmem>>, vector<8x128xf32>,
    } else {
    }
    %c0 = arith.constant 0 : index
    %c0_1 = arith.constant 0 : index
    %3 = vector.load %arg2[%c0, %c0_1] : memref<16x128xf32, #tpu.memory_space<vmem>>, vector<16x128xf32>
    %c0_2 = arith.constant 0 : index
    %c0_3 = arith.constant 0 : index
    %4 = vector.load %arg3[%c0_2, %c0_3] : memref<16x128xf32, #tpu.memory_space<vmem>>, vector<16x128xf32>
    %5 = math.absf %3 : vector<16x128xf32>
    %cst = arith.constant 0.000000e+00 : f32
    %6 = vector.broadcast %cst : f32 to vector<16x128xf32>
    %7 = arith.subf %6, %5 : vector<16x128xf32>
    %8 = math.exp %7 : vector<16x128xf32>
    %cst_4 = arith.constant 1.000000e+00 : f32
    %9 = vector.broadcast %cst_4 : f32 to vector<16x128xf32>
    %10 = arith.addf %9, %8 : vector<16x128xf32>
    %11 = math.log %10 : vector<16x128xf32>
    %cst_5 = arith.constant 0.000000e+00 : f32
    %12 = vector.broadcast %cst_5 : f32 to vector<16x128xf32>
    %13 = arith.maximumf %3, %12 : vector<16x128xf32>
    %14 = arith.subf %3, %13 : vector<16x128xf32>
    %15 = arith.subf %14, %11 : vector<16x128xf32>
    %cst_6 = arith.constant -13.8155107 : f32
    %16 = vector.broadcast %cst_6 : f32 to vector<16x128xf32>
    %17 = arith.maximumf %15, %16 : vector<16x128xf32>
    %cst_7 = arith.constant 0.000000e+00 : f32
    %18 = vector.broadcast %cst_7 : f32 to vector<16x128xf32>
    %19 = arith.subf %18, %13 : vector<16x128xf32>
    %20 = arith.subf %19, %11 : vector<16x128xf32>
    %cst_8 = arith.constant -13.8155107 : f32
    %21 = vector.broadcast %cst_8 : f32 to vector<16x128xf32>
    %22 = arith.maximumf %20, %21 : vector<16x128xf32>
    %23 = math.exp %22 : vector<16x128xf32>
    %24 = math.exp %17 : vector<16x128xf32>
    %25 = arith.mulf %23, %23 : vector<16x128xf32>
    %26 = arith.mulf %24, %24 : vector<16x128xf32>
    %27 = arith.mulf %25, %17 : vector<16x128xf32>
    %28 = arith.mulf %27, %4 : vector<16x128xf32>
    %29 = arith.mulf %26, %22 : vector<16x128xf32>
    %cst_9 = arith.constant 1.000000e+00 : f32
    %30 = vector.broadcast %cst_9 : f32 to vector<16x128xf32>
    %31 = arith.subf %30, %4 : vector<16x128xf32>
    %32 = arith.mulf %29, %31 : vector<16x128xf32>
    %cst_10 = arith.constant -5.000000e-01 : f32
    %33 = vector.broadcast %cst_10 : f32 to vector<16x128xf32>
    %34 = arith.mulf %33, %28 : vector<16x128xf32>
    %cst_11 = arith.constant -5.000000e-01 : f32
    %35 = vector.broadcast %cst_11 : f32 to vector<16x128xf32>
    %36 = arith.mulf %35, %32 : vector<16x128xf32>
    %37 = arith.addf %34, %36 : vector<16x128xf32>
    %c0_12 = arith.constant 0 : index
    %c0_13 = arith.constant 0 : index
    %38 = vector.load %arg5[%c0_12, %c0_13] : memref<8x128xf32, #tpu.memory_space<vmem>>, vector<8x128xf32>
    %39 = vector.shape_cast %37 : vector<16x128xf32> to vector<2x8x128xf32>
    %cst_14 = arith.constant dense<0.000000e+00> : vector<8x128xf32>
    %40 = vector.multi_reduction <add>, %39, %cst_14 [0] : vector<2x8x128xf32> to vector<8x128xf32>
    %41 = arith.addf %38, %40 : vector<8x128xf32>
    %c0_15 = arith.constant 0 : index
    %c0_16 = arith.constant 0 : index
    %42 = vector.load %arg5[%c0_15, %c0_16] : memref<8x128xf32, #tpu.memory_space<vmem>>, vector<8x128xf32>
    tpu.vector_store %arg5[%c0_15, %c0_16], %41 {strides = array<i32>} : memref<8x128xf32, #tpu.memory_space<vmem>>, vector<8x128xf32>,
    %c0_i32_17 = arith.constant 0 : i32
    %43 = arith.cmpi eq, %arg1, %c0_i32_17 : i32
    %44 = arith.extui %43 : i1 to i32
    %c0_i32_18 = arith.constant 0 : i32
    %45 = arith.cmpi ne, %44, %c0_i32_18 : i32
    scf.if %45 {
      %c0_19 = arith.constant 0 : index
      %c0_20 = arith.constant 0 : index
      %46 = vector.load %arg5[%c0_19, %c0_20] : memref<8x128xf32, #tpu.memory_space<vmem>>, vector<8x128xf32>
      %c0_21 = arith.constant 0 : index
      %c0_22 = arith.constant 0 : index
      %c0_23 = arith.constant 0 : index
      %47 = vector.load %arg4[%c0_21, %c0_22, %c0_23] : memref<1x8x128xf32, #tpu.memory_space<vmem>>, vector<1x8x128xf32>
      %48 = vector.shape_cast %47 : vector<1x8x128xf32> to vector<8x128xf32>
      %49 = vector.shape_cast %46 : vector<8x128xf32> to vector<1x8x128xf32>
      tpu.vector_store %arg4[%c0_21, %c0_22, %c0_23], %49 {strides = array<i32>} : memref<1x8x128xf32, #tpu.memory_space<vmem>>, vector<1x8x128xf32>,
    } else {
    }
    return
  }
  func.func @transform_0(%arg0: i32, %arg1: i32) -> (i32, i32) {
    %c1_i32 = arith.constant 1 : i32
    %0 = arith.muli %arg0, %c1_i32 : i32
    %1 = arith.addi %0, %arg1 : i32
    %c0_i32 = arith.constant 0 : i32
    %c0_i32_0 = arith.constant 0 : i32
    return %1, %c0_i32 : i32, i32
  }
  func.func @transform_1(%arg0: i32, %arg1: i32) -> (i32, i32) {
    %c1_i32 = arith.constant 1 : i32
    %0 = arith.muli %arg0, %c1_i32 : i32
    %1 = arith.addi %0, %arg1 : i32
    %c0_i32 = arith.constant 0 : i32
    %c0_i32_0 = arith.constant 0 : i32
    return %1, %c0_i32 : i32, i32
  }
  func.func @transform_2(%arg0: i32, %arg1: i32) -> (i32, i32, i32) {
    %c0_i32 = arith.constant 0 : i32
    %c0_i32_0 = arith.constant 0 : i32
    %c0_i32_1 = arith.constant 0 : i32
    return %arg0, %c0_i32, %c0_i32_0 : i32, i32, i32
  }
}

</mosaic_0001>

<llo_original>
// kernel: tpu_custom_call.1
$region0: #{tpu_custom_call.1}
  #allocation0 [shape = 'u32[]', space=smem, size = 0x4, offset = 0x4, fixed_abs, tag = 'smem constant byte address 0x4 - core index']
  #allocation1 [shape = 'u32[72,128]{1,0:T(1,128)}', space=vmem, size = 0x9000, scoped, tag = 'internal scratch']
  #allocation2 [shape = 'f32[8,128]{1,0:T(8,128)}', space=vmem, size = 0x1000, scoped, tag = 'scratch operand']
  %s0 = inlined_call_operand.hbm [shape: f32[16,128], index: 0, kind: input, shape index: {}]
  %s1 = inlined_call_operand.hbm [shape: f32[16,128], index: 1, kind: input, shape index: {}]
  %s2 = inlined_call_operand.hbm [shape: f32[1,8,128], index: 2, kind: output, shape index: {}]
  %s3 = sld [smem:[#allocation0]]
  $region34: #{tpu_custom_call.1} parent=0
    _
  %s5 = ssub.s32 1, %s3
  %s6 = scalar_select 0, %s5, %s3
  $region1: #{tpu_custom_call.1} parent=0
    #allocation3 [shape = 'u8[8192]{0}', space=vmem, size = 0x2000, scoped, tag = 'input window, operand 0, single buffered']
    #allocation4 [shape = 's32[1]{0}', space=sflag, size = 0x4, scoped, tag = 'scoped memory for tpu_custom_call.1']
    #allocation5 [shape = 's32[1]{0}', space=sflag, size = 0x4, scoped, tag = 'scoped memory for tpu_custom_call.1']
    #allocation6 [shape = 'u8[8192]{0}', space=vmem, size = 0x2000, scoped, tag = 'input window, operand 1, single buffered']
    #allocation7 [shape = 's32[1]{0}', space=sflag, size = 0x4, scoped, tag = 'scoped memory for tpu_custom_call.1']
    #allocation8 [shape = 'u8[4096]{0}', space=vmem, size = 0x1000, scoped, tag = 'output window, operand 0, single buffered']
    %7 = vsyncpa [#allocation4], 0
    %8 = vsyncpa [#allocation7], 0
    %9 = vsyncpa [#allocation5], 0
    // Predicated region
    $region2: #{tpu_custom_call.1} parent=1 // pred_check
      _
    $region3: #{tpu_custom_call.1} parent=1 // pred_check_branch
      %11 = sbr.rel (0) target = $region5
    $region4: #{tpu_custom_call.1} parent=1 // pred_region
      %s12 = sadd.s32 0, 0
      %s13 = smul.u32 2, %s12
      %15 = vsyncadd [#allocation4], 0
      %s16 = smul.addr %s13, 8
      %s17 = scalar_lea.hbm %s0, %s16
      %s18 = sshll.u32 %s17, 4
      %s19 = int_to_ptr.hbm [resolvable:$true] %s18
      %s20 = sshll.u32 [#allocation3], 4
      %s21 = int_to_ptr.vmem [resolvable:$true] %s20
      %26 = dma.hbm_to_vmem [thread:$0]  %s19, 256, %s21, [#allocation4], 128, 128, 8
    $region5: #{tpu_custom_call.1} parent=1 // pred_fallthru
      _
    // Predicated region
    $region6: #{tpu_custom_call.1} parent=1 // pred_check
      _
    $region7: #{tpu_custom_call.1} parent=1 // pred_check_branch
      %28 = sbr.rel (0) target = $region9
    $region8: #{tpu_custom_call.1} parent=1 // pred_region
      %s29 = sadd.s32 0, 0
      %s30 = smul.u32 2, %s29
      %32 = vsyncadd [#allocation7], 0
      %s33 = smul.addr %s30, 8
      %s34 = scalar_lea.hbm %s1, %s33
      %s35 = sshll.u32 %s34, 4
      %s36 = int_to_ptr.hbm [resolvable:$true] %s35
      %s37 = sshll.u32 [#allocation6], 4
      %s38 = int_to_ptr.vmem [resolvable:$true] %s37
      %43 = dma.hbm_to_vmem [thread:$0]  %s36, 256, %s38, [#allocation7], 128, 128, 8
    $region9: #{tpu_custom_call.1} parent=1 // pred_fallthru
      _
    // Predicated region
    $region10: #{tpu_custom_call.1} parent=1 // pred_check
      _
    $region11: #{tpu_custom_call.1} parent=1 // pred_check_branch
      %45 = sbr.rel (0) target = $region13
    $region12: #{tpu_custom_call.1} parent=1 // pred_region
      %47 = dma.done [#allocation4], 256
    $region13: #{tpu_custom_call.1} parent=1 // pred_fallthru
      _
    // Predicated region
    $region14: #{tpu_custom_call.1} parent=1 // pred_check
      _
    $region15: #{tpu_custom_call.1} parent=1 // pred_check_branch
      %49 = sbr.rel (0) target = $region17
    $region16: #{tpu_custom_call.1} parent=1 // pred_region
      %51 = dma.done [#allocation7], 256
    $region17: #{tpu_custom_call.1} parent=1 // pred_fallthru
      _
    %s52 = sadd.s32 0, 0
    %s53 = smul.u32 2, %s52
    %s54 = sadd.s32 0, 0
    %s55 = smul.u32 2, %s54
    %p56 = scmp.eq.s32.totalorder 0, 0
    // Predicated region
    $region18: #{tpu_custom_call.1} parent=1 // pred_check
      %p57 = pneg %p56
    $region19: #{tpu_custom_call.1} parent=1 // pred_check_branch
      %59 = sbr.rel (%p57) target = $region21
    $region20: #{tpu_custom_call.1} parent=1 // pred_region
      %60 = vst [vmem:[#allocation2] sm:$0xff] 0.0
    $region21: #{tpu_custom_call.1} parent=1 // pred_fallthru
      _
    %v61 = vld [vmem:[#allocation3] sm:$0xff]
    %v62 = vld [vmem:[#allocation3 + $0x8] sm:$0xff]
    %v63 = vld [vmem:[#allocation6] sm:$0xff]
    %v64 = vld [vmem:[#allocation6 + $0x8] sm:$0xff]
    %v65 = vand.u32 2147483647, %v61
    %v66 = vand.u32 2147483647, %v62
    %v67 = vsub.f32 0.0, %v65
    %v68 = vsub.f32 0.0, %v66
    %v69 = vmul.f32 %v67, 1.442695
    %v70 = vpow.pop %v69
    %v71 = vmul.f32 %v68, 1.442695
    %v72 = vpow.pop %v71
    %v73 = vadd.f32 %v70, 1.0
    %v74 = vadd.f32 %v72, 1.0
    %v75 = vlog2.pop %v73
    %v76 = vmul.f32 %v75, 0.6931472
    %v77 = vlog2.pop %v74
    %v78 = vmul.f32 %v77, 0.6931472
    %v79 = vmax.f32 %v61, 0.0
    %v80 = vmax.f32 %v62, 0.0
    %v81 = vsub.f32 %v61, %v79
    %v82 = vsub.f32 %v62, %v80
    %v83 = vsub.f32 %v81, %v76
    %v84 = vsub.f32 %v82, %v78
    %v85 = vmax.f32 %v83, -13.815511
    %v86 = vmax.f32 %v84, -13.815511
    %v87 = vsub.f32 0.0, %v79
    %v88 = vsub.f32 0.0, %v80
    %v89 = vsub.f32 %v87, %v76
    %v90 = vsub.f32 %v88, %v78
    %v91 = vmax.f32 %v89, -13.815511
    %v92 = vmax.f32 %v90, -13.815511
    %v93 = vmul.f32 %v91, 1.442695
    %v94 = vpow.pop %v93
    %v95 = vmul.f32 %v92, 1.442695
    %v96 = vpow.pop %v95
    %v97 = vmul.f32 %v85, 1.442695
    %v98 = vpow.pop %v97
    %v99 = vmul.f32 %v86, 1.442695
    %v100 = vpow.pop %v99
    %v101 = vmul.f32 %v94, %v94
    %v102 = vmul.f32 %v96, %v96
    %v103 = vmul.f32 %v98, %v98
    %v104 = vmul.f32 %v100, %v100
    %v105 = vmul.f32 %v101, %v85
    %v106 = vmul.f32 %v102, %v86
    %v107 = vmul.f32 %v105, %v63
    %v108 = vmul.f32 %v106, %v64
    %v109 = vmul.f32 %v103, %v91
    %v110 = vmul.f32 %v104, %v92
    %v111 = vsub.f32 1.0, %v63
    %v112 = vsub.f32 1.0, %v64
    %v113 = vmul.f32 %v109, %v111
    %v114 = vmul.f32 %v110, %v112
    %v115 = vmul.f32 %v107, -0.5
    %v116 = vmul.f32 %v108, -0.5
    %v117 = vmul.f32 %v113, -0.5
    %v118 = vmul.f32 %v114, -0.5
    %v119 = vadd.f32 %v115, %v117
    %v120 = vadd.f32 %v116, %v118
    %v121 = vld [vmem:[#allocation2] sm:$0xff]
    %v122 = vadd.f32 %v119, %v120
    %v123 = vadd.f32 %v121, %v122
    %124 = vst [vmem:[#allocation2] sm:$0xff] %v123
    // Predicated region
    $region22: #{tpu_custom_call.1} parent=1 // pred_check
      %p125 = pneg %p56
    $region23: #{tpu_custom_call.1} parent=1 // pred_check_branch
      %127 = sbr.rel (%p125) target = $region25
    $region24: #{tpu_custom_call.1} parent=1 // pred_region
      %v128 = vld [vmem:[#allocation2] sm:$0xff]
      %129 = vst [vmem:[#allocation8] sm:$0xff] %v128
    $region25: #{tpu_custom_call.1} parent=1 // pred_fallthru
      _
    // Predicated region
    $region26: #{tpu_custom_call.1} parent=1 // pred_check
      _
    $region27: #{tpu_custom_call.1} parent=1 // pred_check_branch
      %131 = sbr.rel (0) target = $region29
    $region28: #{tpu_custom_call.1} parent=1 // pred_region
      %133 = vsyncadd [#allocation5], 0
      %s135 = sshll.u32 [#allocation8], 4
      %s136 = int_to_ptr.vmem [resolvable:$true] %s135
      %s137 = sshll.u32 %s2, 4
      %s138 = int_to_ptr.hbm [resolvable:$true] %s137
      %140 = dma.vmem_to_hbm [thread:$0]  %s136, 128, %s138, [#allocation5]
    $region29: #{tpu_custom_call.1} parent=1 // pred_fallthru
      _
    // Predicated region
    $region30: #{tpu_custom_call.1} parent=1 // pred_check
      _
    $region31: #{tpu_custom_call.1} parent=1 // pred_check_branch
      %142 = sbr.rel (0) target = $region33
    $region32: #{tpu_custom_call.1} parent=1 // pred_region
      %144 = dma.done [#allocation5], 128
    $region33: #{tpu_custom_call.1} parent=1 // pred_fallthru
      _
    %145 = vsyncpa [#allocation4], 1
    %146 = vsyncpa [#allocation7], 1
    %147 = vsyncpa [#allocation5], 1

</llo_original>
